<compile_context>
chip_gen: v6e
topology: v6e:2x2x1
jax: 0.10.0
libtpu: 0.0.40
codegen_flags: <defaults>
</compile_context>

<pallas_src>
import jax
import jax.numpy as jnp
from jax.experimental import pallas as pl
from jax.experimental.pallas import tpu as pltpu


def _lstm_classifier_kernel(x_ref, len_ref, wih_ref, whh_ref, b_ref,
                            wlin_ref, blin_ref, out_ref):
    """Single invocation: full forward pass.

    x_ref   : (T*B, E) bf16  embedded tokens, TIME-major rows (row t*B + b)
    len_ref : (B, 1)   int32 sequence lengths (read once)
    wih_ref : (E, 4H)  bf16  W_ih^T   (PyTorch gate order i, f, g, o)
    whh_ref : (H, 4H)  bf16  W_hh^T
    b_ref   : (1, 4H)  f32   b_ih + b_hh
    wlin_ref: (H, 5)   f32   linear weight^T
    blin_ref: (1, 5)   f32   linear bias
    out_ref : (B, 5)   f32   softmax probabilities
    """
    B = len_ref.shape[0]
    H = whh_ref.shape[0]
    T = x_ref.shape[0] // B

    # ---- Hoisted input projection: one batched MXU matmul over all timesteps,
    #      combined bias added once.
    gx = jnp.dot(x_ref[...], wih_ref[...],
                 preferred_element_type=jnp.float32)          # (T*B, 4H) f32
    gx = gx + b_ref[...]

    lens = len_ref[...]                                       # (B, 1) int32, single tiny load
    whh = whh_ref[...]                                        # (H, 4H) bf16, loaded once

    h = jnp.zeros((B, H), jnp.float32)
    c = jnp.zeros((B, H), jnp.float32)

    # ---- Fully unrolled time recurrence (T is small & static). Only the
    #      h @ W_hh matmul sits on the serial dependency chain; the per-step
    #      gate slab is a contiguous static sublane slice of gx.
    for t in range(T):
        g_t = gx[t * B:(t + 1) * B, :]                        # (B, 4H), contiguous rows
        gates = g_t + jnp.dot(h.astype(whh.dtype), whh,
                              preferred_element_type=jnp.float32)

        i_g = jax.nn.sigmoid(gates[:, 0 * H:1 * H])
        f_g = jax.nn.sigmoid(gates[:, 1 * H:2 * H])
        g_g = jnp.tanh(gates[:, 2 * H:3 * H])
        o_g = jax.nn.sigmoid(gates[:, 3 * H:4 * H])

        c_new = f_g * c + i_g * g_g
        h_new = o_g * jnp.tanh(c_new)

        # pack_padded_sequence semantics: only advance state while t < length[b]
        valid = t < lens                                      # (B, 1) bool, static t
        h = jnp.where(valid, h_new, h)
        c = jnp.where(valid, c_new, c)

    # ---- Linear(H, 5) + Softmax epilogue (runs once).
    logits = jnp.dot(h, wlin_ref[...],
                     preferred_element_type=jnp.float32) + blin_ref[...]   # (B, 5)
    m = jnp.max(logits, axis=-1, keepdims=True)
    e = jnp.exp(logits - m)
    denom = jnp.sum(e, axis=-1, keepdims=True)
    out_ref[...] = e * pl.reciprocal(denom, approx=True)      # EUP reciprocal


def classifier_forward(x_tokens, lengths, params):
    """x_tokens: (B, T) int32 token ids, lengths: (B,) int32 (sorted descending)."""
    B, T = x_tokens.shape
    emb_table = params["embedding"]                 # (V, E) bf16, row 0 zeros (padding_idx=0)
    E = emb_table.shape[1]
    H = params["w_hh_t"].shape[0]

    # Embedding gather + dropout (eval mode => identity) stay in plain JAX glue.
    # Gather with transposed token ids so the embedded slab comes out TIME-major
    # directly (no transpose of the (T, B, E) activation tensor itself).
    # TODO(synk): training-mode dropout (p=0.2) with RNG is not reproduced; eval identity used.
    emb_tm = emb_table[x_tokens.T]                  # (T, B, E) bf16
    x2d = emb_tm.reshape(T * B, E)                  # free leading-dim merge (no HBM round trip)
    lens2d = lengths.astype(jnp.int32).reshape(B, 1)

    # Everything fits trivially in VMEM at these shapes (few KiB total).
    # TODO(synk): for large B on v7x, add a leading "parallel" batch grid axis
    # (two TensorCores) and re-budget the VMEM-resident slab against 64 MiB.
    out = pl.pallas_call(
        _lstm_classifier_kernel,
        out_shape=jax.ShapeDtypeStruct((B, 5), jnp.float32),
        grid=(1,),
        in_specs=[
            pl.BlockSpec((T * B, E), lambda i: (0, 0)),          # embedded slab (time-major)
            pl.BlockSpec((B, 1), lambda i: (0, 0)),              # lengths
            pl.BlockSpec((E, 4 * H), lambda i: (0, 0)),          # W_ih^T
            pl.BlockSpec((H, 4 * H), lambda i: (0, 0)),          # W_hh^T
            pl.BlockSpec((1, 4 * H), lambda i: (0, 0)),          # bias (b_ih + b_hh)
            pl.BlockSpec((H, 5), lambda i: (0, 0)),              # linear W^T
            pl.BlockSpec((1, 5), lambda i: (0, 0)),              # linear bias
        ],
        out_specs=pl.BlockSpec((B, 5), lambda i: (0, 0)),
        compiler_params=pltpu.CompilerParams(
            dimension_semantics=("arbitrary",)),
    )(x2d, lens2d,
      params["w_ih_t"], params["w_hh_t"], params["b"],
      params["w_lin_t"], params["b_lin"])
    return out


def init_params(key, vocab_size, embedding_dim, hidden_dim):
    ks = jax.random.split(key, 6)
    scale = 0.1
    emb = scale * jax.random.normal(ks[0], (vocab_size, embedding_dim), jnp.float32)
    emb = emb.at[0].set(0.0)                        # padding_idx=0
    w_ih = scale * jax.random.normal(ks[1], (4 * hidden_dim, embedding_dim), jnp.float32)
    w_hh = scale * jax.random.normal(ks[2], (4 * hidden_dim, hidden_dim), jnp.float32)
    b_ih = scale * jax.random.normal(ks[3], (4 * hidden_dim,), jnp.float32)
    b_hh = scale * jax.random.normal(ks[4], (4 * hidden_dim,), jnp.float32)
    w_lin = scale * jax.random.normal(ks[5], (5, hidden_dim), jnp.float32)
    b_lin = jnp.zeros((5,), jnp.float32)
    return {
        # MXU-facing tensors in bf16 (v6e/v7x native); f32 elsewhere (v5e-safe).
        "embedding": emb.astype(jnp.bfloat16),                      # (V, E)
        "w_ih_t": w_ih.T.astype(jnp.bfloat16),                      # (E, 4H)
        "w_hh_t": w_hh.T.astype(jnp.bfloat16),                      # (H, 4H)
        "b": (b_ih + b_hh).reshape(1, 4 * hidden_dim),              # (1, 4H) f32
        "w_lin_t": w_lin.T,                                         # (H, 5)  f32
        "b_lin": b_lin.reshape(1, 5),                               # (1, 5)  f32
    }


if __name__ == "__main__":
    vocab_size, embedding_dim, hidden_dim = 50, 16, 32
    B, T = 2, 8

    key = jax.random.PRNGKey(0)
    k_tok, k_par = jax.random.split(key)
    params = init_params(k_par, vocab_size, embedding_dim, hidden_dim)

    # Tokens: nonzero ids, then zero-pad beyond each length (lengths sorted descending,
    # matching pack_padded_sequence's enforce_sorted=True default; lengths >= 1).
    lengths = jnp.array([8, 5], dtype=jnp.int32)
    tok = jax.random.randint(k_tok, (B, T), 1, vocab_size, dtype=jnp.int32)
    pad_mask = jnp.arange(T)[None, :] < lengths[:, None]
    tok = jnp.where(pad_mask, tok, 0)

    probs = classifier_forward(tok, lengths, params)
    probs = jax.block_until_ready(probs)

    assert probs.shape == (B, 5)
    assert bool(jnp.all(jnp.isfinite(probs)))
    # approx (EUP) reciprocal in the softmax denominator -> allow small normalization slack
    assert bool(jnp.allclose(jnp.sum(probs, axis=-1), 1.0, atol=2e-3))
    print("KERNEL_OK")
</pallas_src>

<mosaic_0001>
module attributes {stable_mosaic.version = 11 : i64} {
  func.func @_lstm_classifier_kernel(%arg0: i32, %arg1: memref<16x16xbf16, #tpu.memory_space<vmem>>, %arg2: memref<2x1xi32, #tpu.memory_space<vmem>>, %arg3: memref<16x128xbf16, #tpu.memory_space<vmem>>, %arg4: memref<32x128xbf16, #tpu.memory_space<vmem>>, %arg5: memref<1x128xf32, #tpu.memory_space<vmem>>, %arg6: memref<32x5xf32, #tpu.memory_space<vmem>>, %arg7: memref<1x5xf32, #tpu.memory_space<vmem>>, %arg8: memref<2x5xf32, #tpu.memory_space<vmem>>) attributes {dimension_semantics = [#tpu.dimension_semantics<arbitrary>], iteration_bounds = array<i64: 1>, scalar_prefetch = 0 : i64, scratch_operands = 0 : i64, tpu.core_type = #tpu.core_type<tc>, window_params = [{pipeline_mode = #tpu.pipeline_mode<synchronous>, transform_indices = @transform_0, window_bounds = array<i64: 16, 16>}, {pipeline_mode = #tpu.pipeline_mode<synchronous>, transform_indices = @transform_1, window_bounds = array<i64: 2, 1>}, {pipeline_mode = #tpu.pipeline_mode<synchronous>, transform_indices = @transform_2, window_bounds = array<i64: 16, 128>}, {pipeline_mode = #tpu.pipeline_mode<synchronous>, transform_indices = @transform_3, window_bounds = array<i64: 32, 128>}, {pipeline_mode = #tpu.pipeline_mode<synchronous>, transform_indices = @transform_4, window_bounds = array<i64: 1, 128>}, {pipeline_mode = #tpu.pipeline_mode<synchronous>, transform_indices = @transform_5, window_bounds = array<i64: 32, 5>}, {pipeline_mode = #tpu.pipeline_mode<synchronous>, transform_indices = @transform_6, window_bounds = array<i64: 1, 5>}, {pipeline_mode = #tpu.pipeline_mode<synchronous>, transform_indices = @transform_7, window_bounds = array<i64: 2, 5>}]} {
    %c0 = arith.constant 0 : index
    %c0_0 = arith.constant 0 : index
    %0 = vector.load %arg1[%c0, %c0_0] : memref<16x16xbf16, #tpu.memory_space<vmem>>, vector<16x16xbf16>
    %c0_1 = arith.constant 0 : index
    %c0_2 = arith.constant 0 : index
    %1 = vector.load %arg3[%c0_1, %c0_2] : memref<16x128xbf16, #tpu.memory_space<vmem>>, vector<16x128xbf16>
    %cst = arith.constant dense<0.000000e+00> : vector<16x128xf32>
    %2 = tpu.matmul %0, %1, %cst {dimension_numbers = #tpu.dot_dimension_numbers<[1], [0], [0], [1], [0, 0, 1, 1], [], []>} : vector<16x16xbf16>, vector<16x128xbf16>, vector<16x128xf32> -> vector<16x128xf32>
    %c0_3 = arith.constant 0 : index
    %c0_4 = arith.constant 0 : index
    %3 = vector.load %arg5[%c0_3, %c0_4] : memref<1x128xf32, #tpu.memory_space<vmem>>, vector<1x128xf32>
    %4 = vector.broadcast %3 : vector<1x128xf32> to vector<16x128xf32>
    %5 = arith.addf %2, %4 : vector<16x128xf32>
    %c0_5 = arith.constant 0 : index
    %c0_6 = arith.constant 0 : index
    %6 = vector.load %arg2[%c0_5, %c0_6] : memref<2x1xi32, #tpu.memory_space<vmem>>, vector<2x1xi32>
    %c0_7 = arith.constant 0 : index
    %c0_8 = arith.constant 0 : index
    %7 = vector.load %arg4[%c0_7, %c0_8] : memref<32x128xbf16, #tpu.memory_space<vmem>>, vector<32x128xbf16>
    %cst_9 = arith.constant 0.000000e+00 : f32
    %8 = vector.broadcast %cst_9 : f32 to vector<2x32xf32>
    %cst_10 = arith.constant 0.000000e+00 : f32
    %9 = vector.broadcast %cst_10 : f32 to vector<2x32xf32>
    %10 = vector.extract_strided_slice %5 {offsets = [0, 0], sizes = [2, 128], strides = [1, 1]} : vector<16x128xf32> to vector<2x128xf32>
    %11 = arith.truncf %8 : vector<2x32xf32> to vector<2x32xbf16>
    %cst_11 = arith.constant dense<0.000000e+00> : vector<2x128xf32>
    %12 = tpu.matmul %11, %7, %cst_11 {dimension_numbers = #tpu.dot_dimension_numbers<[1], [0], [0], [1], [0, 0, 1, 1], [], []>} : vector<2x32xbf16>, vector<32x128xbf16>, vector<2x128xf32> -> vector<2x128xf32>
    %13 = arith.addf %10, %12 : vector<2x128xf32>
    %14 = vector.extract_strided_slice %13 {offsets = [0, 0], sizes = [2, 32], strides = [1, 1]} : vector<2x128xf32> to vector<2x32xf32>
    %15 = arith.negf %14 : vector<2x32xf32>
    %16 = math.exp %15 : vector<2x32xf32>
    %cst_12 = arith.constant 1.000000e+00 : f32
    %17 = vector.broadcast %cst_12 : f32 to vector<2x32xf32>
    %18 = arith.addf %17, %16 : vector<2x32xf32>
    %19 = arith.divf %17, %18 : vector<2x32xf32>
    %20 = vector.extract_strided_slice %13 {offsets = [0, 32], sizes = [2, 32], strides = [1, 1]} : vector<2x128xf32> to vector<2x32xf32>
    %21 = arith.negf %20 : vector<2x32xf32>
    %22 = math.exp %21 : vector<2x32xf32>
    %cst_13 = arith.constant 1.000000e+00 : f32
    %23 = vector.broadcast %cst_13 : f32 to vector<2x32xf32>
    %24 = arith.addf %23, %22 : vector<2x32xf32>
    %25 = arith.divf %23, %24 : vector<2x32xf32>
    %26 = vector.extract_strided_slice %13 {offsets = [0, 64], sizes = [2, 32], strides = [1, 1]} : vector<2x128xf32> to vector<2x32xf32>
    %27 = math.tanh %26 : vector<2x32xf32>
    %28 = vector.extract_strided_slice %13 {offsets = [0, 96], sizes = [2, 32], strides = [1, 1]} : vector<2x128xf32> to vector<2x32xf32>
    %29 = arith.negf %28 : vector<2x32xf32>
    %30 = math.exp %29 : vector<2x32xf32>
    %cst_14 = arith.constant 1.000000e+00 : f32
    %31 = vector.broadcast %cst_14 : f32 to vector<2x32xf32>
    %32 = arith.addf %31, %30 : vector<2x32xf32>
    %33 = arith.divf %31, %32 : vector<2x32xf32>
    %34 = arith.mulf %25, %9 : vector<2x32xf32>
    %35 = arith.mulf %19, %27 : vector<2x32xf32>
    %36 = arith.addf %34, %35 : vector<2x32xf32>
    %37 = math.tanh %36 : vector<2x32xf32>
    %38 = arith.mulf %33, %37 : vector<2x32xf32>
    %c0_i32 = arith.constant 0 : i32
    %39 = vector.broadcast %c0_i32 : i32 to vector<2x1xi32>
    %40 = arith.cmpi sgt, %6, %39 : vector<2x1xi32>
    %41 = vector.shape_cast %40 : vector<2x1xi1> to vector<2x1xi1>
    %42 = vector.broadcast %41 : vector<2x1xi1> to vector<2x32xi1>
    %43 = arith.select %42, %38, %8 : vector<2x32xi1>, vector<2x32xf32>
    %44 = vector.shape_cast %40 : vector<2x1xi1> to vector<2x1xi1>
    %45 = vector.broadcast %44 : vector<2x1xi1> to vector<2x32xi1>
    %46 = arith.select %45, %36, %9 : vector<2x32xi1>, vector<2x32xf32>
    %47 = vector.extract_strided_slice %5 {offsets = [2, 0], sizes = [2, 128], strides = [1, 1]} : vector<16x128xf32> to vector<2x128xf32>
    %48 = arith.truncf %43 : vector<2x32xf32> to vector<2x32xbf16>
    %cst_15 = arith.constant dense<0.000000e+00> : vector<2x128xf32>
    %49 = tpu.matmul %48, %7, %cst_15 {dimension_numbers = #tpu.dot_dimension_numbers<[1], [0], [0], [1], [0, 0, 1, 1], [], []>} : vector<2x32xbf16>, vector<32x128xbf16>, vector<2x128xf32> -> vector<2x128xf32>
    %50 = arith.addf %47, %49 : vector<2x128xf32>
    %51 = vector.extract_strided_slice %50 {offsets = [0, 0], sizes = [2, 32], strides = [1, 1]} : vector<2x128xf32> to vector<2x32xf32>
    %52 = arith.negf %51 : vector<2x32xf32>
    %53 = math.exp %52 : vector<2x32xf32>
    %cst_16 = arith.constant 1.000000e+00 : f32
    %54 = vector.broadcast %cst_16 : f32 to vector<2x32xf32>
    %55 = arith.addf %54, %53 : vector<2x32xf32>
    %56 = arith.divf %54, %55 : vector<2x32xf32>
    %57 = vector.extract_strided_slice %50 {offsets = [0, 32], sizes = [2, 32], strides = [1, 1]} : vector<2x128xf32> to vector<2x32xf32>
    %58 = arith.negf %57 : vector<2x32xf32>
    %59 = math.exp %58 : vector<2x32xf32>
    %cst_17 = arith.constant 1.000000e+00 : f32
    %60 = vector.broadcast %cst_17 : f32 to vector<2x32xf32>
    %61 = arith.addf %60, %59 : vector<2x32xf32>
    %62 = arith.divf %60, %61 : vector<2x32xf32>
    %63 = vector.extract_strided_slice %50 {offsets = [0, 64], sizes = [2, 32], strides = [1, 1]} : vector<2x128xf32> to vector<2x32xf32>
    %64 = math.tanh %63 : vector<2x32xf32>
    %65 = vector.extract_strided_slice %50 {offsets = [0, 96], sizes = [2, 32], strides = [1, 1]} : vector<2x128xf32> to vector<2x32xf32>
    %66 = arith.negf %65 : vector<2x32xf32>
    %67 = math.exp %66 : vector<2x32xf32>
    %cst_18 = arith.constant 1.000000e+00 : f32
    %68 = vector.broadcast %cst_18 : f32 to vector<2x32xf32>
    %69 = arith.addf %68, %67 : vector<2x32xf32>
    %70 = arith.divf %68, %69 : vector<2x32xf32>
    %71 = arith.mulf %62, %46 : vector<2x32xf32>
    %72 = arith.mulf %56, %64 : vector<2x32xf32>
    %73 = arith.addf %71, %72 : vector<2x32xf32>
    %74 = math.tanh %73 : vector<2x32xf32>
    %75 = arith.mulf %70, %74 : vector<2x32xf32>
    %c1_i32 = arith.constant 1 : i32
    %76 = vector.broadcast %c1_i32 : i32 to vector<2x1xi32>
    %77 = arith.cmpi sgt, %6, %76 : vector<2x1xi32>
    %78 = vector.shape_cast %77 : vector<2x1xi1> to vector<2x1xi1>
    %79 = vector.broadcast %78 : vector<2x1xi1> to vector<2x32xi1>
    %80 = arith.select %79, %75, %43 : vector<2x32xi1>, vector<2x32xf32>
    %81 = vector.shape_cast %77 : vector<2x1xi1> to vector<2x1xi1>
    %82 = vector.broadcast %81 : vector<2x1xi1> to vector<2x32xi1>
    %83 = arith.select %82, %73, %46 : vector<2x32xi1>, vector<2x32xf32>
    %84 = vector.extract_strided_slice %5 {offsets = [4, 0], sizes = [2, 128], strides = [1, 1]} : vector<16x128xf32> to vector<2x128xf32>
    %85 = arith.truncf %80 : vector<2x32xf32> to vector<2x32xbf16>
    %cst_19 = arith.constant dense<0.000000e+00> : vector<2x128xf32>
    %86 = tpu.matmul %85, %7, %cst_19 {dimension_numbers = #tpu.dot_dimension_numbers<[1], [0], [0], [1], [0, 0, 1, 1], [], []>} : vector<2x32xbf16>, vector<32x128xbf16>, vector<2x128xf32> -> vector<2x128xf32>
    %87 = arith.addf %84, %86 : vector<2x128xf32>
    %88 = vector.extract_strided_slice %87 {offsets = [0, 0], sizes = [2, 32], strides = [1, 1]} : vector<2x128xf32> to vector<2x32xf32>
    %89 = arith.negf %88 : vector<2x32xf32>
    %90 = math.exp %89 : vector<2x32xf32>
    %cst_20 = arith.constant 1.000000e+00 : f32
    %91 = vector.broadcast %cst_20 : f32 to vector<2x32xf32>
    %92 = arith.addf %91, %90 : vector<2x32xf32>
    %93 = arith.divf %91, %92 : vector<2x32xf32>
    %94 = vector.extract_strided_slice %87 {offsets = [0, 32], sizes = [2, 32], strides = [1, 1]} : vector<2x128xf32> to vector<2x32xf32>
    %95 = arith.negf %94 : vector<2x32xf32>
    %96 = math.exp %95 : vector<2x32xf32>
    %cst_21 = arith.constant 1.000000e+00 : f32
    %97 = vector.broadcast %cst_21 : f32 to vector<2x32xf32>
    %98 = arith.addf %97, %96 : vector<2x32xf32>
    %99 = arith.divf %97, %98 : vector<2x32xf32>
    %100 = vector.extract_strided_slice %87 {offsets = [0, 64], sizes = [2, 32], strides = [1, 1]} : vector<2x128xf32> to vector<2x32xf32>
    %101 = math.tanh %100 : vector<2x32xf32>
    %102 = vector.extract_strided_slice %87 {offsets = [0, 96], sizes = [2, 32], strides = [1, 1]} : vector<2x128xf32> to vector<2x32xf32>
    %103 = arith.negf %102 : vector<2x32xf32>
    %104 = math.exp %103 : vector<2x32xf32>
    %cst_22 = arith.constant 1.000000e+00 : f32
    %105 = vector.broadcast %cst_22 : f32 to vector<2x32xf32>
    %106 = arith.addf %105, %104 : vector<2x32xf32>
    %107 = arith.divf %105, %106 : vector<2x32xf32>
    %108 = arith.mulf %99, %83 : vector<2x32xf32>
    %109 = arith.mulf %93, %101 : vector<2x32xf32>
    %110 = arith.addf %108, %109 : vector<2x32xf32>
    %111 = math.tanh %110 : vector<2x32xf32>
    %112 = arith.mulf %107, %111 : vector<2x32xf32>
    %c2_i32 = arith.constant 2 : i32
    %113 = vector.broadcast %c2_i32 : i32 to vector<2x1xi32>
    %114 = arith.cmpi sgt, %6, %113 : vector<2x1xi32>
    %115 = vector.shape_cast %114 : vector<2x1xi1> to vector<2x1xi1>
    %116 = vector.broadcast %115 : vector<2x1xi1> to vector<2x32xi1>
    %117 = arith.select %116, %112, %80 : vector<2x32xi1>, vector<2x32xf32>
    %118 = vector.shape_cast %114 : vector<2x1xi1> to vector<2x1xi1>
    %119 = vector.broadcast %118 : vector<2x1xi1> to vector<2x32xi1>
    %120 = arith.select %119, %110, %83 : vector<2x32xi1>, vector<2x32xf32>
    %121 = vector.extract_strided_slice %5 {offsets = [6, 0], sizes = [2, 128], strides = [1, 1]} : vector<16x128xf32> to vector<2x128xf32>
    %122 = arith.truncf %117 : vector<2x32xf32> to vector<2x32xbf16>
    %cst_23 = arith.constant dense<0.000000e+00> : vector<2x128xf32>
    %123 = tpu.matmul %122, %7, %cst_23 {dimension_numbers = #tpu.dot_dimension_numbers<[1], [0], [0], [1], [0, 0, 1, 1], [], []>} : vector<2x32xbf16>, vector<32x128xbf16>, vector<2x128xf32> -> vector<2x128xf32>
    %124 = arith.addf %121, %123 : vector<2x128xf32>
    %125 = vector.extract_strided_slice %124 {offsets = [0, 0], sizes = [2, 32], strides = [1, 1]} : vector<2x128xf32> to vector<2x32xf32>
    %126 = arith.negf %125 : vector<2x32xf32>
    %127 = math.exp %126 : vector<2x32xf32>
    %cst_24 = arith.constant 1.000000e+00 : f32
    %128 = vector.broadcast %cst_24 : f32 to vector<2x32xf32>
    %129 = arith.addf %128, %127 : vector<2x32xf32>
    %130 = arith.divf %128, %129 : vector<2x32xf32>
    %131 = vector.extract_strided_slice %124 {offsets = [0, 32], sizes = [2, 32], strides = [1, 1]} : vector<2x128xf32> to vector<2x32xf32>
    %132 = arith.negf %131 : vector<2x32xf32>
    %133 = math.exp %132 : vector<2x32xf32>
    %cst_25 = arith.constant 1.000000e+00 : f32
    %134 = vector.broadcast %cst_25 : f32 to vector<2x32xf32>
    %135 = arith.addf %134, %133 : vector<2x32xf32>
    %136 = arith.divf %134, %135 : vector<2x32xf32>
    %137 = vector.extract_strided_slice %124 {offsets = [0, 64], sizes = [2, 32], strides = [1, 1]} : vector<2x128xf32> to vector<2x32xf32>
    %138 = math.tanh %137 : vector<2x32xf32>
    %139 = vector.extract_strided_slice %124 {offsets = [0, 96], sizes = [2, 32], strides = [1, 1]} : vector<2x128xf32> to vector<2x32xf32>
    %140 = arith.negf %139 : vector<2x32xf32>
    %141 = math.exp %140 : vector<2x32xf32>
    %cst_26 = arith.constant 1.000000e+00 : f32
    %142 = vector.broadcast %cst_26 : f32 to vector<2x32xf32>
    %143 = arith.addf %142, %141 : vector<2x32xf32>
    %144 = arith.divf %142, %143 : vector<2x32xf32>
    %145 = arith.mulf %136, %120 : vector<2x32xf32>
    %146 = arith.mulf %130, %138 : vector<2x32xf32>
    %147 = arith.addf %145, %146 : vector<2x32xf32>
    %148 = math.tanh %147 : vector<2x32xf32>
    %149 = arith.mulf %144, %148 : vector<2x32xf32>
    %c3_i32 = arith.constant 3 : i32
    %150 = vector.broadcast %c3_i32 : i32 to vector<2x1xi32>
    %151 = arith.cmpi sgt, %6, %150 : vector<2x1xi32>
    %152 = vector.shape_cast %151 : vector<2x1xi1> to vector<2x1xi1>
    %153 = vector.broadcast %152 : vector<2x1xi1> to vector<2x32xi1>
    %154 = arith.select %153, %149, %117 : vector<2x32xi1>, vector<2x32xf32>
    %155 = vector.shape_cast %151 : vector<2x1xi1> to vector<2x1xi1>
    %156 = vector.broadcast %155 : vector<2x1xi1> to vector<2x32xi1>
    %157 = arith.select %156, %147, %120 : vector<2x32xi1>, vector<2x32xf32>
    %158 = vector.extract_strided_slice %5 {offsets = [8, 0], sizes = [2, 128], strides = [1, 1]} : vector<16x128xf32> to vector<2x128xf32>
    %159 = arith.truncf %154 : vector<2x32xf32> to vector<2x32xbf16>
    %cst_27 = arith.constant dense<0.000000e+00> : vector<2x128xf32>
    %160 = tpu.matmul %159, %7, %cst_27 {dimension_numbers = #tpu.dot_dimension_numbers<[1], [0], [0], [1], [0, 0, 1, 1], [], []>} : vector<2x32xbf16>, vector<32x128xbf16>, vector<2x128xf32> -> vector<2x128xf32>
    %161 = arith.addf %158, %160 : vector<2x128xf32>
    %162 = vector.extract_strided_slice %161 {offsets = [0, 0], sizes = [2, 32], strides = [1, 1]} : vector<2x128xf32> to vector<2x32xf32>
    %163 = arith.negf %162 : vector<2x32xf32>
    %164 = math.exp %163 : vector<2x32xf32>
    %cst_28 = arith.constant 1.000000e+00 : f32
    %165 = vector.broadcast %cst_28 : f32 to vector<2x32xf32>
    %166 = arith.addf %165, %164 : vector<2x32xf32>
    %167 = arith.divf %165, %166 : vector<2x32xf32>
    %168 = vector.extract_strided_slice %161 {offsets = [0, 32], sizes = [2, 32], strides = [1, 1]} : vector<2x128xf32> to vector<2x32xf32>
    %169 = arith.negf %168 : vector<2x32xf32>
    %170 = math.exp %169 : vector<2x32xf32>
    %cst_29 = arith.constant 1.000000e+00 : f32
    %171 = vector.broadcast %cst_29 : f32 to vector<2x32xf32>
    %172 = arith.addf %171, %170 : vector<2x32xf32>
    %173 = arith.divf %171, %172 : vector<2x32xf32>
    %174 = vector.extract_strided_slice %161 {offsets = [0, 64], sizes = [2, 32], strides = [1, 1]} : vector<2x128xf32> to vector<2x32xf32>
    %175 = math.tanh %174 : vector<2x32xf32>
    %176 = vector.extract_strided_slice %161 {offsets = [0, 96], sizes = [2, 32], strides = [1, 1]} : vector<2x128xf32> to vector<2x32xf32>
    %177 = arith.negf %176 : vector<2x32xf32>
    %178 = math.exp %177 : vector<2x32xf32>
    %cst_30 = arith.constant 1.000000e+00 : f32
    %179 = vector.broadcast %cst_30 : f32 to vector<2x32xf32>
    %180 = arith.addf %179, %178 : vector<2x32xf32>
    %181 = arith.divf %179, %180 : vector<2x32xf32>
    %182 = arith.mulf %173, %157 : vector<2x32xf32>
    %183 = arith.mulf %167, %175 : vector<2x32xf32>
    %184 = arith.addf %182, %183 : vector<2x32xf32>
    %185 = math.tanh %184 : vector<2x32xf32>
    %186 = arith.mulf %181, %185 : vector<2x32xf32>
    %c4_i32 = arith.constant 4 : i32
    %187 = vector.broadcast %c4_i32 : i32 to vector<2x1xi32>
    %188 = arith.cmpi sgt, %6, %187 : vector<2x1xi32>
    %189 = vector.shape_cast %188 : vector<2x1xi1> to vector<2x1xi1>
    %190 = vector.broadcast %189 : vector<2x1xi1> to vector<2x32xi1>
    %191 = arith.select %190, %186, %154 : vector<2x32xi1>, vector<2x32xf32>
    %192 = vector.shape_cast %188 : vector<2x1xi1> to vector<2x1xi1>
    %193 = vector.broadcast %192 : vector<2x1xi1> to vector<2x32xi1>
    %194 = arith.select %193, %184, %157 : vector<2x32xi1>, vector<2x32xf32>
    %195 = vector.extract_strided_slice %5 {offsets = [10, 0], sizes = [2, 128], strides = [1, 1]} : vector<16x128xf32> to vector<2x128xf32>
    %196 = arith.truncf %191 : vector<2x32xf32> to vector<2x32xbf16>
    %cst_31 = arith.constant dense<0.000000e+00> : vector<2x128xf32>
    %197 = tpu.matmul %196, %7, %cst_31 {dimension_numbers = #tpu.dot_dimension_numbers<[1], [0], [0], [1], [0, 0, 1, 1], [], []>} : vector<2x32xbf16>, vector<32x128xbf16>, vector<2x128xf32> -> vector<2x128xf32>
    %198 = arith.addf %195, %197 : vector<2x128xf32>
    %199 = vector.extract_strided_slice %198 {offsets = [0, 0], sizes = [2, 32], strides = [1, 1]} : vector<2x128xf32> to vector<2x32xf32>
    %200 = arith.negf %199 : vector<2x32xf32>
    %201 = math.exp %200 : vector<2x32xf32>
    %cst_32 = arith.constant 1.000000e+00 : f32
    %202 = vector.broadcast %cst_32 : f32 to vector<2x32xf32>
    %203 = arith.addf %202, %201 : vector<2x32xf32>
    %204 = arith.divf %202, %203 : vector<2x32xf32>
    %205 = vector.extract_strided_slice %198 {offsets = [0, 32], sizes = [2, 32], strides = [1, 1]} : vector<2x128xf32> to vector<2x32xf32>
    %206 = arith.negf %205 : vector<2x32xf32>
    %207 = math.exp %206 : vector<2x32xf32>
    %cst_33 = arith.constant 1.000000e+00 : f32
    %208 = vector.broadcast %cst_33 : f32 to vector<2x32xf32>
    %209 = arith.addf %208, %207 : vector<2x32xf32>
    %210 = arith.divf %208, %209 : vector<2x32xf32>
    %211 = vector.extract_strided_slice %198 {offsets = [0, 64], sizes = [2, 32], strides = [1, 1]} : vector<2x128xf32> to vector<2x32xf32>
    %212 = math.tanh %211 : vector<2x32xf32>
    %213 = vector.extract_strided_slice %198 {offsets = [0, 96], sizes = [2, 32], strides = [1, 1]} : vector<2x128xf32> to vector<2x32xf32>
    %214 = arith.negf %213 : vector<2x32xf32>
    %215 = math.exp %214 : vector<2x32xf32>
    %cst_34 = arith.constant 1.000000e+00 : f32
    %216 = vector.broadcast %cst_34 : f32 to vector<2x32xf32>
    %217 = arith.addf %216, %215 : vector<2x32xf32>
    %218 = arith.divf %216, %217 : vector<2x32xf32>
    %219 = arith.mulf %210, %194 : vector<2x32xf32>
    %220 = arith.mulf %204, %212 : vector<2x32xf32>
    %221 = arith.addf %219, %220 : vector<2x32xf32>
    %222 = math.tanh %221 : vector<2x32xf32>
    %223 = arith.mulf %218, %222 : vector<2x32xf32>
    %c5_i32 = arith.constant 5 : i32
    %224 = vector.broadcast %c5_i32 : i32 to vector<2x1xi32>
    %225 = arith.cmpi sgt, %6, %224 : vector<2x1xi32>
    %226 = vector.shape_cast %225 : vector<2x1xi1> to vector<2x1xi1>
    %227 = vector.broadcast %226 : vector<2x1xi1> to vector<2x32xi1>
    %228 = arith.select %227, %223, %191 : vector<2x32xi1>, vector<2x32xf32>
    %229 = vector.shape_cast %225 : vector<2x1xi1> to vector<2x1xi1>
    %230 = vector.broadcast %229 : vector<2x1xi1> to vector<2x32xi1>
    %231 = arith.select %230, %221, %194 : vector<2x32xi1>, vector<2x32xf32>
    %232 = vector.extract_strided_slice %5 {offsets = [12, 0], sizes = [2, 128], strides = [1, 1]} : vector<16x128xf32> to vector<2x128xf32>
    %233 = arith.truncf %228 : vector<2x32xf32> to vector<2x32xbf16>
    %cst_35 = arith.constant dense<0.000000e+00> : vector<2x128xf32>
    %234 = tpu.matmul %233, %7, %cst_35 {dimension_numbers = #tpu.dot_dimension_numbers<[1], [0], [0], [1], [0, 0, 1, 1], [], []>} : vector<2x32xbf16>, vector<32x128xbf16>, vector<2x128xf32> -> vector<2x128xf32>
    %235 = arith.addf %232, %234 : vector<2x128xf32>
    %236 = vector.extract_strided_slice %235 {offsets = [0, 0], sizes = [2, 32], strides = [1, 1]} : vector<2x128xf32> to vector<2x32xf32>
    %237 = arith.negf %236 : vector<2x32xf32>
    %238 = math.exp %237 : vector<2x32xf32>
    %cst_36 = arith.constant 1.000000e+00 : f32
    %239 = vector.broadcast %cst_36 : f32 to vector<2x32xf32>
    %240 = arith.addf %239, %238 : vector<2x32xf32>
    %241 = arith.divf %239, %240 : vector<2x32xf32>
    %242 = vector.extract_strided_slice %235 {offsets = [0, 32], sizes = [2, 32], strides = [1, 1]} : vector<2x128xf32> to vector<2x32xf32>
    %243 = arith.negf %242 : vector<2x32xf32>
    %244 = math.exp %243 : vector<2x32xf32>
    %cst_37 = arith.constant 1.000000e+00 : f32
    %245 = vector.broadcast %cst_37 : f32 to vector<2x32xf32>
    %246 = arith.addf %245, %244 : vector<2x32xf32>
    %247 = arith.divf %245, %246 : vector<2x32xf32>
    %248 = vector.extract_strided_slice %235 {offsets = [0, 64], sizes = [2, 32], strides = [1, 1]} : vector<2x128xf32> to vector<2x32xf32>
    %249 = math.tanh %248 : vector<2x32xf32>
    %250 = vector.extract_strided_slice %235 {offsets = [0, 96], sizes = [2, 32], strides = [1, 1]} : vector<2x128xf32> to vector<2x32xf32>
    %251 = arith.negf %250 : vector<2x32xf32>
    %252 = math.exp %251 : vector<2x32xf32>
    %cst_38 = arith.constant 1.000000e+00 : f32
    %253 = vector.broadcast %cst_38 : f32 to vector<2x32xf32>
    %254 = arith.addf %253, %252 : vector<2x32xf32>
    %255 = arith.divf %253, %254 : vector<2x32xf32>
    %256 = arith.mulf %247, %231 : vector<2x32xf32>
    %257 = arith.mulf %241, %249 : vector<2x32xf32>
    %258 = arith.addf %256, %257 : vector<2x32xf32>
    %259 = math.tanh %258 : vector<2x32xf32>
    %260 = arith.mulf %255, %259 : vector<2x32xf32>
    %c6_i32 = arith.constant 6 : i32
    %261 = vector.broadcast %c6_i32 : i32 to vector<2x1xi32>
    %262 = arith.cmpi sgt, %6, %261 : vector<2x1xi32>
    %263 = vector.shape_cast %262 : vector<2x1xi1> to vector<2x1xi1>
    %264 = vector.broadcast %263 : vector<2x1xi1> to vector<2x32xi1>
    %265 = arith.select %264, %260, %228 : vector<2x32xi1>, vector<2x32xf32>
    %266 = vector.shape_cast %262 : vector<2x1xi1> to vector<2x1xi1>
    %267 = vector.broadcast %266 : vector<2x1xi1> to vector<2x32xi1>
    %268 = arith.select %267, %258, %231 : vector<2x32xi1>, vector<2x32xf32>
    %269 = vector.extract_strided_slice %5 {offsets = [14, 0], sizes = [2, 128], strides = [1, 1]} : vector<16x128xf32> to vector<2x128xf32>
    %270 = arith.truncf %265 : vector<2x32xf32> to vector<2x32xbf16>
    %cst_39 = arith.constant dense<0.000000e+00> : vector<2x128xf32>
    %271 = tpu.matmul %270, %7, %cst_39 {dimension_numbers = #tpu.dot_dimension_numbers<[1], [0], [0], [1], [0, 0, 1, 1], [], []>} : vector<2x32xbf16>, vector<32x128xbf16>, vector<2x128xf32> -> vector<2x128xf32>
    %272 = arith.addf %269, %271 : vector<2x128xf32>
    %273 = vector.extract_strided_slice %272 {offsets = [0, 0], sizes = [2, 32], strides = [1, 1]} : vector<2x128xf32> to vector<2x32xf32>
    %274 = arith.negf %273 : vector<2x32xf32>
    %275 = math.exp %274 : vector<2x32xf32>
    %cst_40 = arith.constant 1.000000e+00 : f32
    %276 = vector.broadcast %cst_40 : f32 to vector<2x32xf32>
    %277 = arith.addf %276, %275 : vector<2x32xf32>
    %278 = arith.divf %276, %277 : vector<2x32xf32>
    %279 = vector.extract_strided_slice %272 {offsets = [0, 32], sizes = [2, 32], strides = [1, 1]} : vector<2x128xf32> to vector<2x32xf32>
    %280 = arith.negf %279 : vector<2x32xf32>
    %281 = math.exp %280 : vector<2x32xf32>
    %cst_41 = arith.constant 1.000000e+00 : f32
    %282 = vector.broadcast %cst_41 : f32 to vector<2x32xf32>
    %283 = arith.addf %282, %281 : vector<2x32xf32>
    %284 = arith.divf %282, %283 : vector<2x32xf32>
    %285 = vector.extract_strided_slice %272 {offsets = [0, 64], sizes = [2, 32], strides = [1, 1]} : vector<2x128xf32> to vector<2x32xf32>
    %286 = math.tanh %285 : vector<2x32xf32>
    %287 = vector.extract_strided_slice %272 {offsets = [0, 96], sizes = [2, 32], strides = [1, 1]} : vector<2x128xf32> to vector<2x32xf32>
    %288 = arith.negf %287 : vector<2x32xf32>
    %289 = math.exp %288 : vector<2x32xf32>
    %cst_42 = arith.constant 1.000000e+00 : f32
    %290 = vector.broadcast %cst_42 : f32 to vector<2x32xf32>
    %291 = arith.addf %290, %289 : vector<2x32xf32>
    %292 = arith.divf %290, %291 : vector<2x32xf32>
    %293 = arith.mulf %284, %268 : vector<2x32xf32>
    %294 = arith.mulf %278, %286 : vector<2x32xf32>
    %295 = arith.addf %293, %294 : vector<2x32xf32>
    %296 = math.tanh %295 : vector<2x32xf32>
    %297 = arith.mulf %292, %296 : vector<2x32xf32>
    %c7_i32 = arith.constant 7 : i32
    %298 = vector.broadcast %c7_i32 : i32 to vector<2x1xi32>
    %299 = arith.cmpi sgt, %6, %298 : vector<2x1xi32>
    %300 = vector.shape_cast %299 : vector<2x1xi1> to vector<2x1xi1>
    %301 = vector.broadcast %300 : vector<2x1xi1> to vector<2x32xi1>
    %302 = arith.select %301, %297, %265 : vector<2x32xi1>, vector<2x32xf32>
    %c0_43 = arith.constant 0 : index
    %c0_44 = arith.constant 0 : index
    %303 = vector.load %arg6[%c0_43, %c0_44] : memref<32x5xf32, #tpu.memory_space<vmem>>, vector<32x5xf32>
    %cst_45 = arith.constant dense<0.000000e+00> : vector<2x5xf32>
    %304 = tpu.matmul %302, %303, %cst_45 {dimension_numbers = #tpu.dot_dimension_numbers<[1], [0], [0], [1], [0, 0, 1, 1], [], []>} : vector<2x32xf32>, vector<32x5xf32>, vector<2x5xf32> -> vector<2x5xf32>
    %c0_46 = arith.constant 0 : index
    %c0_47 = arith.constant 0 : index
    %305 = vector.load %arg7[%c0_46, %c0_47] : memref<1x5xf32, #tpu.memory_space<vmem>>, vector<1x5xf32>
    %306 = vector.broadcast %305 : vector<1x5xf32> to vector<2x5xf32>
    %307 = arith.addf %304, %306 : vector<2x5xf32>
    %cst_48 = arith.constant dense<0xFF800000> : vector<2xf32>
    %308 = vector.multi_reduction <maximumf>, %307, %cst_48 [1] : vector<2x5xf32> to vector<2xf32>
    %309 = vector.shape_cast %308 : vector<2xf32> to vector<2x1xf32>
    %310 = vector.broadcast %309 : vector<2x1xf32> to vector<2x5xf32>
    %311 = arith.subf %307, %310 : vector<2x5xf32>
    %312 = math.exp %311 : vector<2x5xf32>
    %cst_49 = arith.constant dense<0.000000e+00> : vector<2xf32>
    %313 = vector.multi_reduction <add>, %312, %cst_49 [1] : vector<2x5xf32> to vector<2xf32>
    %314 = vector.shape_cast %313 : vector<2xf32> to vector<2x1xf32>
    %315 = tpu.reciprocal %314 {approx = true} : vector<2x1xf32> -> vector<2x1xf32>
    %316 = vector.broadcast %315 : vector<2x1xf32> to vector<2x5xf32>
    %317 = arith.mulf %312, %316 : vector<2x5xf32>
    %c0_50 = arith.constant 0 : index
    %c0_51 = arith.constant 0 : index
    %318 = vector.load %arg8[%c0_50, %c0_51] : memref<2x5xf32, #tpu.memory_space<vmem>>, vector<2x5xf32>
    tpu.vector_store %arg8[%c0_50, %c0_51], %317 {strides = array<i32>} : memref<2x5xf32, #tpu.memory_space<vmem>>, vector<2x5xf32>,
    return
  }
  func.func @transform_0(%arg0: i32) -> (i32, i32) {
    %c0_i32 = arith.constant 0 : i32
    %c0_i32_0 = arith.constant 0 : i32
    %c0_i32_1 = arith.constant 0 : i32
    return %c0_i32, %c0_i32_0 : i32, i32
  }
  func.func @transform_1(%arg0: i32) -> (i32, i32) {
    %c0_i32 = arith.constant 0 : i32
    %c0_i32_0 = arith.constant 0 : i32
    %c0_i32_1 = arith.constant 0 : i32
    return %c0_i32, %c0_i32_0 : i32, i32
  }
  func.func @transform_2(%arg0: i32) -> (i32, i32) {
    %c0_i32 = arith.constant 0 : i32
    %c0_i32_0 = arith.constant 0 : i32
    %c0_i32_1 = arith.constant 0 : i32
    return %c0_i32, %c0_i32_0 : i32, i32
  }
  func.func @transform_3(%arg0: i32) -> (i32, i32) {
    %c0_i32 = arith.constant 0 : i32
    %c0_i32_0 = arith.constant 0 : i32
    %c0_i32_1 = arith.constant 0 : i32
    return %c0_i32, %c0_i32_0 : i32, i32
  }
  func.func @transform_4(%arg0: i32) -> (i32, i32) {
    %c0_i32 = arith.constant 0 : i32
    %c0_i32_0 = arith.constant 0 : i32
    %c0_i32_1 = arith.constant 0 : i32
    return %c0_i32, %c0_i32_0 : i32, i32
  }
  func.func @transform_5(%arg0: i32) -> (i32, i32) {
    %c0_i32 = arith.constant 0 : i32
    %c0_i32_0 = arith.constant 0 : i32
    %c0_i32_1 = arith.constant 0 : i32
    return %c0_i32, %c0_i32_0 : i32, i32
  }
  func.func @transform_6(%arg0: i32) -> (i32, i32) {
    %c0_i32 = arith.constant 0 : i32
    %c0_i32_0 = arith.constant 0 : i32
    %c0_i32_1 = arith.constant 0 : i32
    return %c0_i32, %c0_i32_0 : i32, i32
  }
  func.func @transform_7(%arg0: i32) -> (i32, i32) {
    %c0_i32 = arith.constant 0 : i32
    %c0_i32_0 = arith.constant 0 : i32
    %c0_i32_1 = arith.constant 0 : i32
    return %c0_i32, %c0_i32_0 : i32, i32
  }
}

</mosaic_0001>

<llo_original>
// kernel: tpu_custom_call.1
$region0: #{tpu_custom_call.1}
  #allocation0 [shape = 'u32[]', space=smem, size = 0x4, offset = 0x4, fixed_abs, tag = 'smem constant byte address 0x4 - core index']
  #allocation1 [shape = 'u32[144,128]{1,0:T(1,128)}', space=vmem, size = 0x12000, scoped, tag = 'internal scratch']
  %s0 = inlined_call_operand.vmem [shape: bf16[16,16], index: 0, kind: input, shape index: {}]
  %s1 = inlined_call_operand.vmem [shape: s32[2,1], index: 1, kind: input, shape index: {}]
  %s2 = inlined_call_operand.vmem [shape: bf16[16,128], index: 2, kind: input, shape index: {}]
  %s3 = inlined_call_operand.vmem [shape: bf16[32,128], index: 3, kind: input, shape index: {}]
  %s4 = inlined_call_operand.vmem [shape: f32[1,128], index: 4, kind: input, shape index: {}]
  %s5 = inlined_call_operand.vmem [shape: f32[32,5], index: 5, kind: input, shape index: {}]
  %s6 = inlined_call_operand.vmem [shape: f32[1,5], index: 6, kind: input, shape index: {}]
  %s7 = inlined_call_operand.hbm [shape: f32[2,5], index: 7, kind: output, shape index: {}]
  %s8 = sld [smem:[#allocation0]]
  $region38: #{tpu_custom_call.1} parent=0
    _
  %s10 = ssub.s32 1, %s8
  %s11 = scalar_select 0, %s10, %s8
  $region1: #{tpu_custom_call.1} parent=0
    #allocation2 [shape = 'u8[1024]{0}', space=vmem, size = 0x400, scoped, tag = 'output window, operand 0, single buffered']
    #allocation3 [shape = 's32[1]{0}', space=sflag, size = 0x4, scoped, tag = 'scoped memory for tpu_custom_call.1']
    %12 = vsyncpa [#allocation3], 0
    // Predicated region
    $region2: #{tpu_custom_call.1} parent=1 // pred_check
      _
    $region3: #{tpu_custom_call.1} parent=1 // pred_check_branch
      %14 = sbr.rel (0) target = $region5
    $region4: #{tpu_custom_call.1} parent=1 // pred_region
      _
    $region5: #{tpu_custom_call.1} parent=1 // pred_fallthru
      _
    // Predicated region
    $region6: #{tpu_custom_call.1} parent=1 // pred_check
      _
    $region7: #{tpu_custom_call.1} parent=1 // pred_check_branch
      %16 = sbr.rel (0) target = $region9
    $region8: #{tpu_custom_call.1} parent=1 // pred_region
      _
    $region9: #{tpu_custom_call.1} parent=1 // pred_fallthru
      _
    // Predicated region
    $region10: #{tpu_custom_call.1} parent=1 // pred_check
      _
    $region11: #{tpu_custom_call.1} parent=1 // pred_check_branch
      %18 = sbr.rel (0) target = $region13
    $region12: #{tpu_custom_call.1} parent=1 // pred_region
      _
    $region13: #{tpu_custom_call.1} parent=1 // pred_fallthru
      _
    // Predicated region
    $region14: #{tpu_custom_call.1} parent=1 // pred_check
      _
    $region15: #{tpu_custom_call.1} parent=1 // pred_check_branch
      %20 = sbr.rel (0) target = $region17
    $region16: #{tpu_custom_call.1} parent=1 // pred_region
      _
    $region17: #{tpu_custom_call.1} parent=1 // pred_fallthru
      _
    // Predicated region
    $region18: #{tpu_custom_call.1} parent=1 // pred_check
      _
    $region19: #{tpu_custom_call.1} parent=1 // pred_check_branch
      %22 = sbr.rel (0) target = $region21
    $region20: #{tpu_custom_call.1} parent=1 // pred_region
      _
    $region21: #{tpu_custom_call.1} parent=1 // pred_fallthru
      _
    // Predicated region
    $region22: #{tpu_custom_call.1} parent=1 // pred_check
      _
    $region23: #{tpu_custom_call.1} parent=1 // pred_check_branch
      %24 = sbr.rel (0) target = $region25
    $region24: #{tpu_custom_call.1} parent=1 // pred_region
      _
    $region25: #{tpu_custom_call.1} parent=1 // pred_fallthru
      _
    // Predicated region
    $region26: #{tpu_custom_call.1} parent=1 // pred_check
      _
    $region27: #{tpu_custom_call.1} parent=1 // pred_check_branch
      %26 = sbr.rel (0) target = $region29
    $region28: #{tpu_custom_call.1} parent=1 // pred_region
      _
    $region29: #{tpu_custom_call.1} parent=1 // pred_fallthru
      _
    %v28 = vld [vmem:[%s0] sm:$0xf]
    %v29 = vld [vmem:[%s0 + $0x4] sm:$0xf]
    %v30 = vld [vmem:[%s2] sm:$0xf]
    %v31 = vld [vmem:[%s2 + $0x4] sm:$0xf]
    %v32 = vld [vmem:[%s4] sm:$0x1]
    %v34 = vlaneseq
    %v35 = vshrl.u32 %v34, 7
    %v36 = vsub.s32 0, %v35
    %v37 = vrot.slane %v32, %v36
    %v41 = vunpack.c.l.b16 %v28
    %v42 = vunpack.c.l.b16 %v29
    %v43 = vpack.c.b16 %v42, %v41
    %v46 = vunpack.c.l.b16 %v30
    %v47 = vunpack.c.l.b16 %v31
    %v48 = vpack.c.b16 %v47, %v46
    %vm50 = vcmask 130048
    %v52 = vsel %vm50, %v43, 0
    %54 = vmatprep.subr.bf16.mxu0 0
    %55 = vmatpush1.bf16.msra.mxu0 0
    %56 = vmatprep.subr.bf16.mxu0 0
    %57 = vmatpush1.bf16.msra.mxu0 0
    %58 = vmatprep.subr.bf16.mxu0 0
    %59 = vmatpush1.bf16.msra.mxu0 0
    %60 = vmatprep.subr.bf16.mxu0 0
    %61 = vmatpush1.bf16.msra.mxu0 0
    %62 = vmatprep.subr.bf16.mxu0 0
    %63 = vmatpush1.bf16.msra.mxu0 0
    %64 = vmatprep.subr.bf16.mxu0 0
    %65 = vmatpush1.bf16.msra.mxu0 0
    %66 = vmatprep.subr.bf16.mxu0 0
    %67 = vmatpush1.bf16.msra.mxu0 0
    %68 = vmatprep.subr.bf16.mxu0 0
    %69 = vmatpush1.bf16.msra.mxu0 %v48
    %70 = vmatprep.subr.bf16.mxu0 0
    %71 = vmatpush2.bf16.msra.mxu0 0
    %72 = vmatprep.subr.bf16.mxu0 0
    %73 = vmatpush2.bf16.msra.mxu0 0
    %74 = vmatprep.subr.bf16.mxu0 0
    %75 = vmatpush2.bf16.msra.mxu0 0
    %76 = vmatprep.subr.bf16.mxu0 0
    %77 = vmatpush2.bf16.msra.mxu0 0
    %78 = vmatprep.subr.bf16.mxu0 0
    %79 = vmatpush2.bf16.msra.mxu0 0
    %80 = vmatprep.subr.bf16.mxu0 0
    %81 = vmatpush2.bf16.msra.mxu0 0
    %82 = vmatprep.subr.bf16.mxu0 0
    %83 = vmatpush2.bf16.msra.mxu0 0
    %84 = vmatprep.subr.bf16.mxu0 0
    %85 = vmatpush2.bf16.msra.mxu0 0
    %86 = vmatprep.mubr.bf16.mxu0 0
    %87 = vmatmul.mubr.bf16.gmra.mxu0 %v52
    %v88 = vpop.f32.mrf.mxu0
    %v89 = vadd.f32 %v37, %v88
    %v90 = vpop.f32.mrf.mxu0
    %v91 = vpop.f32.mrf.mxu0
    %v92 = vadd.f32 %v37, %v91
    %v93 = vpop.f32.mrf.mxu0
    %94 = vdwg.mxu0
    %v95 = vld [vmem:[%s1] sm:$0x3]
    %v96 = vld [vmem:[%s3] sm:$0xf]
    %v97 = vld [vmem:[%s3 + $0x4] sm:$0xf]
    %v98 = vld [vmem:[%s3 + $0x8] sm:$0xf]
    %v99 = vld [vmem:[%s3 + $0xc] sm:$0xf]
    %v104 = vunpack.c.l.b16 %v96
    %v105 = vunpack.c.l.b16 %v97
    %v106 = vunpack.c.l.b16 %v98
    %v107 = vunpack.c.l.b16 %v99
    %v108 = vpack.c.b16 %v105, %v104
    %v109 = vpack.c.b16 %v107, %v106
    %vm112 = vcmask 261120
    %v114 = vsel %vm112, 0, 0
    %116 = vmatprep.subr.bf16.mxu0 0
    %117 = vmatpush1.bf16.msra.mxu0 0
    %118 = vmatprep.subr.bf16.mxu0 0
    %119 = vmatpush1.bf16.msra.mxu0 0
    %120 = vmatprep.subr.bf16.mxu0 0
    %121 = vmatpush1.bf16.msra.mxu0 0
    %122 = vmatprep.subr.bf16.mxu0 0
    %123 = vmatpush1.bf16.msra.mxu0 0
    %124 = vmatprep.subr.bf16.mxu0 0
    %125 = vmatpush1.bf16.msra.mxu0 0
    %126 = vmatprep.subr.bf16.mxu0 0
    %127 = vmatpush1.bf16.msra.mxu0 0
    %128 = vmatprep.subr.bf16.mxu0 0
    %129 = vmatpush1.bf16.msra.mxu0 %v109
    %130 = vmatprep.subr.bf16.mxu0 0
    %131 = vmatpush1.bf16.msra.mxu0 %v108
    %132 = vmatprep.subr.bf16.mxu0 0
    %133 = vmatpush2.bf16.msra.mxu0 0
    %134 = vmatprep.subr.bf16.mxu0 0
    %135 = vmatpush2.bf16.msra.mxu0 0
    %136 = vmatprep.subr.bf16.mxu0 0
    %137 = vmatpush2.bf16.msra.mxu0 0
    %138 = vmatprep.subr.bf16.mxu0 0
    %139 = vmatpush2.bf16.msra.mxu0 0
    %140 = vmatprep.subr.bf16.mxu0 0
    %141 = vmatpush2.bf16.msra.mxu0 0
    %142 = vmatprep.subr.bf16.mxu0 0
    %143 = vmatpush2.bf16.msra.mxu0 0
    %144 = vmatprep.subr.bf16.mxu0 0
    %145 = vmatpush2.bf16.msra.mxu0 0
    %146 = vmatprep.subr.bf16.mxu0 0
    %147 = vmatpush2.bf16.msra.mxu0 0
    %148 = vmatprep.mubr.bf16.mxu0 0
    %149 = vmatmul.mubr.bf16.gmra.mxu0 %v114
    %v150 = vpop.f32.mrf.mxu0
    %v151 = vadd.f32 0.0, %v150
    %v152 = vpop.f32.mrf.mxu0
    %v153 = vpop.f32.mrf.mxu0
    %v154 = vpop.f32.mrf.mxu0
    %155 = vdwg.mxu0
    %v156 = vadd.f32 %v89, %v151
    %v157 = vxor.u32 %v156, 2147483648
    %v158 = vmul.f32 %v157, 1.442695
    %v159 = vpow.pop %v158
    %v160 = vadd.f32 %v159, 1.0
    %v161 = vrcp.pop %v160
    %v162 = vmul.f32 1.0, %v161
    %v163 = vtanh.pop %v156
    %v164 = vmul.f32 %v162, 0.0
    %166 = vrot.lane.b32.xlu0 %v163, 64
    %v167 = vpop.permute.xlu0 %166
    %v169 = vmul.f32 %v162, %v167
    %171 = vrot.lane.b32.xlu0 %v169, 32
    %v172 = vpop.permute.xlu0 %171
    %v174 = vadd.f32 %v164, %v172
    %v175 = vtanh.pop %v174
    %177 = vrot.lane.b32.xlu0 %v175, 64
    %v178 = vpop.permute.xlu0 %177
    %v180 = vmul.f32 %v162, %v178
    %vm181 = vcmp.gt.s32.totalorder %v95, 0
    %v182 = vsel %vm181, 1, 0
    %183 = vset.pattern.permute.xlu0 0
    %184 = vperm.xlu0 %183, %v182
    %v185 = vpop.permute.xlu0 %184
    %vm186 = vcmp.eq.s32.totalorder %v185, 1
    %v187 = vsel %vm186, %v180, 0.0
    %v188 = vsel %vm186, %v174, 0.0
    %v189 = vpack.c.bf16 %v187, %v187
    %191 = vrot.lane.b32.xlu0 %v189, 32
    %v192 = vpop.permute.xlu0 %191
    %v194 = vsel %vm112, %v192, 0
    %196 = vmatprep.subr.bf16.mxu0 0
    %197 = vmatpush1.bf16.msra.mxu0 0
    %198 = vmatprep.subr.bf16.mxu0 0
    %199 = vmatpush1.bf16.msra.mxu0 0
    %200 = vmatprep.subr.bf16.mxu0 0
    %201 = vmatpush1.bf16.msra.mxu0 0
    %202 = vmatprep.subr.bf16.mxu0 0
    %203 = vmatpush1.bf16.msra.mxu0 0
    %204 = vmatprep.subr.bf16.mxu0 0
    %205 = vmatpush1.bf16.msra.mxu0 0
    %206 = vmatprep.subr.bf16.mxu0 0
    %207 = vmatpush1.bf16.msra.mxu0 0
    %208 = vmatprep.subr.bf16.mxu0 0
    %209 = vmatpush1.bf16.msra.mxu0 %v109
    %210 = vmatprep.subr.bf16.mxu0 0
    %211 = vmatpush1.bf16.msra.mxu0 %v108
    %212 = vmatprep.subr.bf16.mxu0 0
    %213 = vmatpush2.bf16.msra.mxu0 0
    %214 = vmatprep.subr.bf16.mxu0 0
    %215 = vmatpush2.bf16.msra.mxu0 0
    %216 = vmatprep.subr.bf16.mxu0 0
    %217 = vmatpush2.bf16.msra.mxu0 0
    %218 = vmatprep.subr.bf16.mxu0 0
    %219 = vmatpush2.bf16.msra.mxu0 0
    %220 = vmatprep.subr.bf16.mxu0 0
    %221 = vmatpush2.bf16.msra.mxu0 0
    %222 = vmatprep.subr.bf16.mxu0 0
    %223 = vmatpush2.bf16.msra.mxu0 0
    %224 = vmatprep.subr.bf16.mxu0 0
    %225 = vmatpush2.bf16.msra.mxu0 0
    %226 = vmatprep.subr.bf16.mxu0 0
    %227 = vmatpush2.bf16.msra.mxu0 0
    %228 = vmatprep.mubr.bf16.mxu0 0
    %229 = vmatmul.mubr.bf16.gmra.mxu0 %v194
    %v230 = vpop.f32.mrf.mxu0
    %v231 = vadd.f32 0.0, %v230
    %v232 = vpop.f32.mrf.mxu0
    %v233 = vpop.f32.mrf.mxu0
    %v234 = vpop.f32.mrf.mxu0
    %235 = vdwg.mxu0
    %v237 = vrot.slane %v231, 6
    %v239 = vadd.f32 %v89, %v237
    %v240 = vxor.u32 %v239, 2147483648
    %v241 = vmul.f32 %v240, 1.442695
    %v242 = vpow.pop %v241
    %v243 = vadd.f32 %v242, 1.0
    %v244 = vrcp.pop %v243
    %v245 = vmul.f32 1.0, %v244
    %v246 = vtanh.pop %v239
    %v248 = vrot.slane %v188, 6
    %v250 = vmul.f32 %v245, %v248
    %252 = vrot.lane.b32.xlu0 %v246, 64
    %v253 = vpop.permute.xlu0 %252
    %v255 = vmul.f32 %v245, %v253
    %257 = vrot.lane.b32.xlu0 %v255, 32
    %v258 = vpop.permute.xlu0 %257
    %v260 = vadd.f32 %v250, %v258
    %v261 = vtanh.pop %v260
    %263 = vrot.lane.b32.xlu0 %v261, 64
    %v264 = vpop.permute.xlu0 %263
    %v266 = vmul.f32 %v245, %v264
    %vm267 = vcmp.gt.s32.totalorder %v95, 1
    %v268 = vsel %vm267, 1, 0
    %269 = vset.pattern.permute.xlu0 0
    %270 = vperm.xlu0 %269, %v268
    %v271 = vpop.permute.xlu0 %270
    %vm272 = vcmp.eq.s32.totalorder %v271, 1
    %v274 = vrot.slane %v266, 2
    %275 = vrot.lane.b32.xlu0 %v274, 32
    %v276 = vpop.permute.xlu0 %275
    %279 = vrot.lane.b32.xlu0 %v187, 32
    %v280 = vpop.permute.xlu0 %279
    %v282 = vsel %vm272, %v276, %v280
    %v284 = vrot.slane %v260, 2
    %285 = vrot.lane.b32.xlu0 %v284, 96
    %v286 = vpop.permute.xlu0 %285
    %288 = vrot.lane.b32.xlu0 %v188, 96
    %v289 = vpop.permute.xlu0 %288
    %v291 = vsel %vm272, %v286, %v289
    %v292 = vpack.c.bf16 %v282, %v282
    %v294 = vsel %vm112, %v292, 0
    %296 = vmatprep.subr.bf16.mxu0 0
    %297 = vmatpush1.bf16.msra.mxu0 0
    %298 = vmatprep.subr.bf16.mxu0 0
    %299 = vmatpush1.bf16.msra.mxu0 0
    %300 = vmatprep.subr.bf16.mxu0 0
    %301 = vmatpush1.bf16.msra.mxu0 0
    %302 = vmatprep.subr.bf16.mxu0 0
    %303 = vmatpush1.bf16.msra.mxu0 0
    %304 = vmatprep.subr.bf16.mxu0 0
    %305 = vmatpush1.bf16.msra.mxu0 0
    %306 = vmatprep.subr.bf16.mxu0 0
    %307 = vmatpush1.bf16.msra.mxu0 0
    %308 = vmatprep.subr.bf16.mxu0 0
    %309 = vmatpush1.bf16.msra.mxu0 %v109
    %310 = vmatprep.subr.bf16.mxu0 0
    %311 = vmatpush1.bf16.msra.mxu0 %v108
    %312 = vmatprep.subr.bf16.mxu0 0
    %313 = vmatpush2.bf16.msra.mxu0 0
    %314 = vmatprep.subr.bf16.mxu0 0
    %315 = vmatpush2.bf16.msra.mxu0 0
    %316 = vmatprep.subr.bf16.mxu0 0
    %317 = vmatpush2.bf16.msra.mxu0 0
    %318 = vmatprep.subr.bf16.mxu0 0
    %319 = vmatpush2.bf16.msra.mxu0 0
    %320 = vmatprep.subr.bf16.mxu0 0
    %321 = vmatpush2.bf16.msra.mxu0 0
    %322 = vmatprep.subr.bf16.mxu0 0
    %323 = vmatpush2.bf16.msra.mxu0 0
    %324 = vmatprep.subr.bf16.mxu0 0
    %325 = vmatpush2.bf16.msra.mxu0 0
    %326 = vmatprep.subr.bf16.mxu0 0
    %327 = vmatpush2.bf16.msra.mxu0 0
    %328 = vmatprep.mubr.bf16.mxu0 0
    %329 = vmatmul.mubr.bf16.gmra.mxu0 %v294
    %v330 = vpop.f32.mrf.mxu0
    %v331 = vadd.f32 0.0, %v330
    %v332 = vpop.f32.mrf.mxu0
    %v333 = vpop.f32.mrf.mxu0
    %v334 = vpop.f32.mrf.mxu0
    %335 = vdwg.mxu0
    %v337 = vrot.slane %v331, 4
    %v339 = vadd.f32 %v89, %v337
    %v340 = vxor.u32 %v339, 2147483648
    %v341 = vmul.f32 %v340, 1.442695
    %v342 = vpow.pop %v341
    %v343 = vadd.f32 %v342, 1.0
    %v344 = vrcp.pop %v343
    %v345 = vmul.f32 1.0, %v344
    %v346 = vtanh.pop %v339
    %v348 = vrot.slane %v291, 4
    %349 = vrot.lane.b32.xlu0 %v348, 32
    %v350 = vpop.permute.xlu0 %349
    %v352 = vmul.f32 %v345, %v350
    %354 = vrot.lane.b32.xlu0 %v346, 64
    %v355 = vpop.permute.xlu0 %354
    %v357 = vmul.f32 %v345, %v355
    %359 = vrot.lane.b32.xlu0 %v357, 32
    %v360 = vpop.permute.xlu0 %359
    %v362 = vadd.f32 %v352, %v360
    %v363 = vtanh.pop %v362
    %365 = vrot.lane.b32.xlu0 %v363, 64
    %v366 = vpop.permute.xlu0 %365
    %v368 = vmul.f32 %v345, %v366
    %vm369 = vcmp.gt.s32.totalorder %v95, 2
    %v370 = vsel %vm369, 1, 0
    %371 = vset.pattern.permute.xlu0 0
    %372 = vperm.xlu0 %371, %v370
    %v373 = vpop.permute.xlu0 %372
    %vm374 = vcmp.eq.s32.totalorder %v373, 1
    %v376 = vrot.slane %v368, 4
    %377 = vrot.lane.b32.xlu0 %v376, 32
    %v378 = vpop.permute.xlu0 %377
    %v380 = vsel %vm374, %v378, %v282
    %v382 = vrot.slane %v362, 4
    %383 = vrot.lane.b32.xlu0 %v382, 96
    %v384 = vpop.permute.xlu0 %383
    %v386 = vsel %vm374, %v384, %v291
    %v387 = vpack.c.bf16 %v380, %v380
    %v389 = vsel %vm112, %v387, 0
    %391 = vmatprep.subr.bf16.mxu0 0
    %392 = vmatpush1.bf16.msra.mxu0 0
    %393 = vmatprep.subr.bf16.mxu0 0
    %394 = vmatpush1.bf16.msra.mxu0 0
    %395 = vmatprep.subr.bf16.mxu0 0
    %396 = vmatpush1.bf16.msra.mxu0 0
    %397 = vmatprep.subr.bf16.mxu0 0
    %398 = vmatpush1.bf16.msra.mxu0 0
    %399 = vmatprep.subr.bf16.mxu0 0
    %400 = vmatpush1.bf16.msra.mxu0 0
    %401 = vmatprep.subr.bf16.mxu0 0
    %402 = vmatpush1.bf16.msra.mxu0 0
    %403 = vmatprep.subr.bf16.mxu0 0
    %404 = vmatpush1.bf16.msra.mxu0 %v109
    %405 = vmatprep.subr.bf16.mxu0 0
    %406 = vmatpush1.bf16.msra.mxu0 %v108
    %407 = vmatprep.subr.bf16.mxu0 0
    %408 = vmatpush2.bf16.msra.mxu0 0
    %409 = vmatprep.subr.bf16.mxu0 0
    %410 = vmatpush2.bf16.msra.mxu0 0
    %411 = vmatprep.subr.bf16.mxu0 0
    %412 = vmatpush2.bf16.msra.mxu0 0
    %413 = vmatprep.subr.bf16.mxu0 0
    %414 = vmatpush2.bf16.msra.mxu0 0
    %415 = vmatprep.subr.bf16.mxu0 0
    %416 = vmatpush2.bf16.msra.mxu0 0
    %417 = vmatprep.subr.bf16.mxu0 0
    %418 = vmatpush2.bf16.msra.mxu0 0
    %419 = vmatprep.subr.bf16.mxu0 0
    %420 = vmatpush2.bf16.msra.mxu0 0
    %421 = vmatprep.subr.bf16.mxu0 0
    %422 = vmatpush2.bf16.msra.mxu0 0
    %423 = vmatprep.mubr.bf16.mxu0 0
    %424 = vmatmul.mubr.bf16.gmra.mxu0 %v389
    %v425 = vpop.f32.mrf.mxu0
    %v426 = vadd.f32 0.0, %v425
    %v427 = vpop.f32.mrf.mxu0
    %v428 = vpop.f32.mrf.mxu0
    %v429 = vpop.f32.mrf.mxu0
    %430 = vdwg.mxu0
    %v432 = vrot.slane %v426, 2
    %v434 = vadd.f32 %v89, %v432
    %v435 = vxor.u32 %v434, 2147483648
    %v436 = vmul.f32 %v435, 1.442695
    %v437 = vpow.pop %v436
    %v438 = vadd.f32 %v437, 1.0
    %v439 = vrcp.pop %v438
    %v440 = vmul.f32 1.0, %v439
    %v441 = vtanh.pop %v434
    %v443 = vrot.slane %v386, 2
    %444 = vrot.lane.b32.xlu0 %v443, 32
    %v445 = vpop.permute.xlu0 %444
    %v447 = vmul.f32 %v440, %v445
    %449 = vrot.lane.b32.xlu0 %v441, 64
    %v450 = vpop.permute.xlu0 %449
    %v452 = vmul.f32 %v440, %v450
    %454 = vrot.lane.b32.xlu0 %v452, 32
    %v455 = vpop.permute.xlu0 %454
    %v457 = vadd.f32 %v447, %v455
    %v458 = vtanh.pop %v457
    %460 = vrot.lane.b32.xlu0 %v458, 64
    %v461 = vpop.permute.xlu0 %460
    %v463 = vmul.f32 %v440, %v461
    %vm464 = vcmp.gt.s32.totalorder %v95, 3
    %v465 = vsel %vm464, 1, 0
    %466 = vset.pattern.permute.xlu0 0
    %467 = vperm.xlu0 %466, %v465
    %v468 = vpop.permute.xlu0 %467
    %vm469 = vcmp.eq.s32.totalorder %v468, 1
    %v471 = vrot.slane %v463, 6
    %472 = vrot.lane.b32.xlu0 %v471, 32
    %v473 = vpop.permute.xlu0 %472
    %v475 = vsel %vm469, %v473, %v380
    %v477 = vrot.slane %v457, 6
    %478 = vrot.lane.b32.xlu0 %v477, 96
    %v479 = vpop.permute.xlu0 %478
    %v481 = vsel %vm469, %v479, %v386
    %v482 = vpack.c.bf16 %v475, %v475
    %v484 = vsel %vm112, %v482, 0
    %486 = vmatprep.subr.bf16.mxu0 0
    %487 = vmatpush1.bf16.msra.mxu0 0
    %488 = vmatprep.subr.bf16.mxu0 0
    %489 = vmatpush1.bf16.msra.mxu0 0
    %490 = vmatprep.subr.bf16.mxu0 0
    %491 = vmatpush1.bf16.msra.mxu0 0
    %492 = vmatprep.subr.bf16.mxu0 0
    %493 = vmatpush1.bf16.msra.mxu0 0
    %494 = vmatprep.subr.bf16.mxu0 0
    %495 = vmatpush1.bf16.msra.mxu0 0
    %496 = vmatprep.subr.bf16.mxu0 0
    %497 = vmatpush1.bf16.msra.mxu0 0
    %498 = vmatprep.subr.bf16.mxu0 0
    %499 = vmatpush1.bf16.msra.mxu0 %v109
    %500 = vmatprep.subr.bf16.mxu0 0
    %501 = vmatpush1.bf16.msra.mxu0 %v108
    %502 = vmatprep.subr.bf16.mxu0 0
    %503 = vmatpush2.bf16.msra.mxu0 0
    %504 = vmatprep.subr.bf16.mxu0 0
    %505 = vmatpush2.bf16.msra.mxu0 0
    %506 = vmatprep.subr.bf16.mxu0 0
    %507 = vmatpush2.bf16.msra.mxu0 0
    %508 = vmatprep.subr.bf16.mxu0 0
    %509 = vmatpush2.bf16.msra.mxu0 0
    %510 = vmatprep.subr.bf16.mxu0 0
    %511 = vmatpush2.bf16.msra.mxu0 0
    %512 = vmatprep.subr.bf16.mxu0 0
    %513 = vmatpush2.bf16.msra.mxu0 0
    %514 = vmatprep.subr.bf16.mxu0 0
    %515 = vmatpush2.bf16.msra.mxu0 0
    %516 = vmatprep.subr.bf16.mxu0 0
    %517 = vmatpush2.bf16.msra.mxu0 0
    %518 = vmatprep.mubr.bf16.mxu0 0
    %519 = vmatmul.mubr.bf16.gmra.mxu0 %v484
    %v520 = vpop.f32.mrf.mxu0
    %v521 = vadd.f32 0.0, %v520
    %v522 = vpop.f32.mrf.mxu0
    %v523 = vpop.f32.mrf.mxu0
    %v524 = vpop.f32.mrf.mxu0
    %525 = vdwg.mxu0
    %v526 = vadd.f32 %v92, %v521
    %v527 = vxor.u32 %v526, 2147483648
    %v528 = vmul.f32 %v527, 1.442695
    %v529 = vpow.pop %v528
    %v530 = vadd.f32 %v529, 1.0
    %v531 = vrcp.pop %v530
    %v532 = vmul.f32 1.0, %v531
    %v533 = vtanh.pop %v526
    %535 = vrot.lane.b32.xlu0 %v481, 32
    %v536 = vpop.permute.xlu0 %535
    %v538 = vmul.f32 %v532, %v536
    %540 = vrot.lane.b32.xlu0 %v533, 64
    %v541 = vpop.permute.xlu0 %540
    %v543 = vmul.f32 %v532, %v541
    %545 = vrot.lane.b32.xlu0 %v543, 32
    %v546 = vpop.permute.xlu0 %545
    %v548 = vadd.f32 %v538, %v546
    %v549 = vtanh.pop %v548
    %551 = vrot.lane.b32.xlu0 %v549, 64
    %v552 = vpop.permute.xlu0 %551
    %v554 = vmul.f32 %v532, %v552
    %vm555 = vcmp.gt.s32.totalorder %v95, 4
    %v556 = vsel %vm555, 1, 0
    %557 = vset.pattern.permute.xlu0 0
    %558 = vperm.xlu0 %557, %v556
    %v559 = vpop.permute.xlu0 %558
    %vm560 = vcmp.eq.s32.totalorder %v559, 1
    %562 = vrot.lane.b32.xlu0 %v475, 96
    %v563 = vpop.permute.xlu0 %562
    %v565 = vsel %vm560, %v554, %v563
    %v566 = vsel %vm560, %v548, %v536
    %v567 = vpack.c.bf16 %v565, %v565
    %569 = vrot.lane.b32.xlu0 %v567, 32
    %v570 = vpop.permute.xlu0 %569
    %v572 = vsel %vm112, %v570, 0
    %574 = vmatprep.subr.bf16.mxu0 0
    %575 = vmatpush1.bf16.msra.mxu0 0
    %576 = vmatprep.subr.bf16.mxu0 0
    %577 = vmatpush1.bf16.msra.mxu0 0
    %578 = vmatprep.subr.bf16.mxu0 0
    %579 = vmatpush1.bf16.msra.mxu0 0
    %580 = vmatprep.subr.bf16.mxu0 0
    %581 = vmatpush1.bf16.msra.mxu0 0
    %582 = vmatprep.subr.bf16.mxu0 0
    %583 = vmatpush1.bf16.msra.mxu0 0
    %584 = vmatprep.subr.bf16.mxu0 0
    %585 = vmatpush1.bf16.msra.mxu0 0
    %586 = vmatprep.subr.bf16.mxu0 0
    %587 = vmatpush1.bf16.msra.mxu0 %v109
    %588 = vmatprep.subr.bf16.mxu0 0
    %589 = vmatpush1.bf16.msra.mxu0 %v108
    %590 = vmatprep.subr.bf16.mxu0 0
    %591 = vmatpush2.bf16.msra.mxu0 0
    %592 = vmatprep.subr.bf16.mxu0 0
    %593 = vmatpush2.bf16.msra.mxu0 0
    %594 = vmatprep.subr.bf16.mxu0 0
    %595 = vmatpush2.bf16.msra.mxu0 0
    %596 = vmatprep.subr.bf16.mxu0 0
    %597 = vmatpush2.bf16.msra.mxu0 0
    %598 = vmatprep.subr.bf16.mxu0 0
    %599 = vmatpush2.bf16.msra.mxu0 0
    %600 = vmatprep.subr.bf16.mxu0 0
    %601 = vmatpush2.bf16.msra.mxu0 0
    %602 = vmatprep.subr.bf16.mxu0 0
    %603 = vmatpush2.bf16.msra.mxu0 0
    %604 = vmatprep.subr.bf16.mxu0 0
    %605 = vmatpush2.bf16.msra.mxu0 0
    %606 = vmatprep.mubr.bf16.mxu0 0
    %607 = vmatmul.mubr.bf16.gmra.mxu0 %v572
    %v608 = vpop.f32.mrf.mxu0
    %v609 = vadd.f32 0.0, %v608
    %v610 = vpop.f32.mrf.mxu0
    %v611 = vpop.f32.mrf.mxu0
    %v612 = vpop.f32.mrf.mxu0
    %613 = vdwg.mxu0
    %v615 = vrot.slane %v609, 6
    %v617 = vadd.f32 %v92, %v615
    %v618 = vxor.u32 %v617, 2147483648
    %v619 = vmul.f32 %v618, 1.442695
    %v620 = vpow.pop %v619
    %v621 = vadd.f32 %v620, 1.0
    %v622 = vrcp.pop %v621
    %v623 = vmul.f32 1.0, %v622
    %v624 = vtanh.pop %v617
    %v626 = vrot.slane %v566, 6
    %v628 = vmul.f32 %v623, %v626
    %630 = vrot.lane.b32.xlu0 %v624, 64
    %v631 = vpop.permute.xlu0 %630
    %v633 = vmul.f32 %v623, %v631
    %635 = vrot.lane.b32.xlu0 %v633, 32
    %v636 = vpop.permute.xlu0 %635
    %v638 = vadd.f32 %v628, %v636
    %v639 = vtanh.pop %v638
    %641 = vrot.lane.b32.xlu0 %v639, 64
    %v642 = vpop.permute.xlu0 %641
    %v644 = vmul.f32 %v623, %v642
    %vm645 = vcmp.gt.s32.totalorder %v95, 5
    %v646 = vsel %vm645, 1, 0
    %647 = vset.pattern.permute.xlu0 0
    %648 = vperm.xlu0 %647, %v646
    %v649 = vpop.permute.xlu0 %648
    %vm650 = vcmp.eq.s32.totalorder %v649, 1
    %v652 = vrot.slane %v644, 2
    %653 = vrot.lane.b32.xlu0 %v652, 32
    %v654 = vpop.permute.xlu0 %653
    %657 = vrot.lane.b32.xlu0 %v565, 32
    %v658 = vpop.permute.xlu0 %657
    %v660 = vsel %vm650, %v654, %v658
    %v662 = vrot.slane %v638, 2
    %663 = vrot.lane.b32.xlu0 %v662, 96
    %v664 = vpop.permute.xlu0 %663
    %666 = vrot.lane.b32.xlu0 %v566, 96
    %v667 = vpop.permute.xlu0 %666
    %v669 = vsel %vm650, %v664, %v667
    %v670 = vpack.c.bf16 %v660, %v660
    %v672 = vsel %vm112, %v670, 0
    %674 = vmatprep.subr.bf16.mxu0 0
    %675 = vmatpush1.bf16.msra.mxu0 0
    %676 = vmatprep.subr.bf16.mxu0 0
    %677 = vmatpush1.bf16.msra.mxu0 0
    %678 = vmatprep.subr.bf16.mxu0 0
    %679 = vmatpush1.bf16.msra.mxu0 0
    %680 = vmatprep.subr.bf16.mxu0 0
    %681 = vmatpush1.bf16.msra.mxu0 0
    %682 = vmatprep.subr.bf16.mxu0 0
    %683 = vmatpush1.bf16.msra.mxu0 0
    %684 = vmatprep.subr.bf16.mxu0 0
    %685 = vmatpush1.bf16.msra.mxu0 0
    %686 = vmatprep.subr.bf16.mxu0 0
    %687 = vmatpush1.bf16.msra.mxu0 %v109
    %688 = vmatprep.subr.bf16.mxu0 0
    %689 = vmatpush1.bf16.msra.mxu0 %v108
    %690 = vmatprep.subr.bf16.mxu0 0
    %691 = vmatpush2.bf16.msra.mxu0 0
    %692 = vmatprep.subr.bf16.mxu0 0
    %693 = vmatpush2.bf16.msra.mxu0 0
    %694 = vmatprep.subr.bf16.mxu0 0
    %695 = vmatpush2.bf16.msra.mxu0 0
    %696 = vmatprep.subr.bf16.mxu0 0
    %697 = vmatpush2.bf16.msra.mxu0 0
    %698 = vmatprep.subr.bf16.mxu0 0
    %699 = vmatpush2.bf16.msra.mxu0 0
    %700 = vmatprep.subr.bf16.mxu0 0
    %701 = vmatpush2.bf16.msra.mxu0 0
    %702 = vmatprep.subr.bf16.mxu0 0
    %703 = vmatpush2.bf16.msra.mxu0 0
    %704 = vmatprep.subr.bf16.mxu0 0
    %705 = vmatpush2.bf16.msra.mxu0 0
    %706 = vmatprep.mubr.bf16.mxu0 0
    %707 = vmatmul.mubr.bf16.gmra.mxu0 %v672
    %v708 = vpop.f32.mrf.mxu0
    %v709 = vadd.f32 0.0, %v708
    %v710 = vpop.f32.mrf.mxu0
    %v711 = vpop.f32.mrf.mxu0
    %v712 = vpop.f32.mrf.mxu0
    %713 = vdwg.mxu0
    %v715 = vrot.slane %v709, 4
    %v717 = vadd.f32 %v92, %v715
    %v718 = vxor.u32 %v717, 2147483648
    %v719 = vmul.f32 %v718, 1.442695
    %v720 = vpow.pop %v719
    %v721 = vadd.f32 %v720, 1.0
    %v722 = vrcp.pop %v721
    %v723 = vmul.f32 1.0, %v722
    %v724 = vtanh.pop %v717
    %v726 = vrot.slane %v669, 4
    %727 = vrot.lane.b32.xlu0 %v726, 32
    %v728 = vpop.permute.xlu0 %727
    %v730 = vmul.f32 %v723, %v728
    %732 = vrot.lane.b32.xlu0 %v724, 64
    %v733 = vpop.permute.xlu0 %732
    %v735 = vmul.f32 %v723, %v733
    %737 = vrot.lane.b32.xlu0 %v735, 32
    %v738 = vpop.permute.xlu0 %737
    %v740 = vadd.f32 %v730, %v738
    %v741 = vtanh.pop %v740
    %743 = vrot.lane.b32.xlu0 %v741, 64
    %v744 = vpop.permute.xlu0 %743
    %v746 = vmul.f32 %v723, %v744
    %vm747 = vcmp.gt.s32.totalorder %v95, 6
    %v748 = vsel %vm747, 1, 0
    %749 = vset.pattern.permute.xlu0 0
    %750 = vperm.xlu0 %749, %v748
    %v751 = vpop.permute.xlu0 %750
    %vm752 = vcmp.eq.s32.totalorder %v751, 1
    %v754 = vrot.slane %v746, 4
    %755 = vrot.lane.b32.xlu0 %v754, 32
    %v756 = vpop.permute.xlu0 %755
    %v758 = vsel %vm752, %v756, %v660
    %v760 = vrot.slane %v740, 4
    %761 = vrot.lane.b32.xlu0 %v760, 96
    %v762 = vpop.permute.xlu0 %761
    %v764 = vsel %vm752, %v762, %v669
    %v765 = vpack.c.bf16 %v758, %v758
    %v767 = vsel %vm112, %v765, 0
    %769 = vmatprep.subr.bf16.mxu0 0
    %770 = vmatpush1.bf16.msra.mxu0 0
    %771 = vmatprep.subr.bf16.mxu0 0
    %772 = vmatpush1.bf16.msra.mxu0 0
    %773 = vmatprep.subr.bf16.mxu0 0
    %774 = vmatpush1.bf16.msra.mxu0 0
    %775 = vmatprep.subr.bf16.mxu0 0
    %776 = vmatpush1.bf16.msra.mxu0 0
    %777 = vmatprep.subr.bf16.mxu0 0
    %778 = vmatpush1.bf16.msra.mxu0 0
    %779 = vmatprep.subr.bf16.mxu0 0
    %780 = vmatpush1.bf16.msra.mxu0 0
    %781 = vmatprep.subr.bf16.mxu0 0
    %782 = vmatpush1.bf16.msra.mxu0 %v109
    %783 = vmatprep.subr.bf16.mxu0 0
    %784 = vmatpush1.bf16.msra.mxu0 %v108
    %785 = vmatprep.subr.bf16.mxu0 0
    %786 = vmatpush2.bf16.msra.mxu0 0
    %787 = vmatprep.subr.bf16.mxu0 0
    %788 = vmatpush2.bf16.msra.mxu0 0
    %789 = vmatprep.subr.bf16.mxu0 0
    %790 = vmatpush2.bf16.msra.mxu0 0
    %791 = vmatprep.subr.bf16.mxu0 0
    %792 = vmatpush2.bf16.msra.mxu0 0
    %793 = vmatprep.subr.bf16.mxu0 0
    %794 = vmatpush2.bf16.msra.mxu0 0
    %795 = vmatprep.subr.bf16.mxu0 0
    %796 = vmatpush2.bf16.msra.mxu0 0
    %797 = vmatprep.subr.bf16.mxu0 0
    %798 = vmatpush2.bf16.msra.mxu0 0
    %799 = vmatprep.subr.bf16.mxu0 0
    %800 = vmatpush2.bf16.msra.mxu0 0
    %801 = vmatprep.mubr.bf16.mxu0 0
    %802 = vmatmul.mubr.bf16.gmra.mxu0 %v767
    %v803 = vpop.f32.mrf.mxu0
    %v804 = vadd.f32 0.0, %v803
    %v805 = vpop.f32.mrf.mxu0
    %v806 = vpop.f32.mrf.mxu0
    %v807 = vpop.f32.mrf.mxu0
    %808 = vdwg.mxu0
    %v810 = vrot.slane %v804, 2
    %v812 = vadd.f32 %v92, %v810
    %v813 = vxor.u32 %v812, 2147483648
    %v814 = vmul.f32 %v813, 1.442695
    %v815 = vpow.pop %v814
    %v816 = vadd.f32 %v815, 1.0
    %v817 = vrcp.pop %v816
    %v818 = vmul.f32 1.0, %v817
    %v819 = vtanh.pop %v812
    %v821 = vrot.slane %v764, 2
    %822 = vrot.lane.b32.xlu0 %v821, 32
    %v823 = vpop.permute.xlu0 %822
    %v825 = vmul.f32 %v818, %v823
    %827 = vrot.lane.b32.xlu0 %v819, 64
    %v828 = vpop.permute.xlu0 %827
    %v830 = vmul.f32 %v818, %v828
    %832 = vrot.lane.b32.xlu0 %v830, 32
    %v833 = vpop.permute.xlu0 %832
    %v835 = vadd.f32 %v825, %v833
    %v836 = vtanh.pop %v835
    %838 = vrot.lane.b32.xlu0 %v836, 64
    %v839 = vpop.permute.xlu0 %838
    %v841 = vmul.f32 %v818, %v839
    %vm842 = vcmp.gt.s32.totalorder %v95, 7
    %v843 = vsel %vm842, 1, 0
    %844 = vset.pattern.permute.xlu0 0
    %845 = vperm.xlu0 %844, %v843
    %v846 = vpop.permute.xlu0 %845
    %vm847 = vcmp.eq.s32.totalorder %v846, 1
    %v849 = vrot.slane %v841, 6
    %850 = vrot.lane.b32.xlu0 %v849, 32
    %v851 = vpop.permute.xlu0 %850
    %v853 = vsel %vm847, %v851, %v758
    %v854 = vld [vmem:[%s5] sm:$0xff]
    %v855 = vld [vmem:[%s5 + $0x8] sm:$0xff]
    %v856 = vld [vmem:[%s5 + $0x10] sm:$0xff]
    %v857 = vld [vmem:[%s5 + $0x18] sm:$0xff]
    %v858 = vld [vmem:[%s6] sm:$0x1]
    %v860 = vlaneseq
    %v861 = vshrl.u32 %v860, 7
    %v862 = vsub.s32 0, %v861
    %v863 = vrot.slane %v858, %v862
    %v866 = vsel %vm112, %v853, 0
    %868 = vmatprep.subr.mxu0 0.0
    %869 = vmatpush1.msra.mxu0 0.0
    %870 = vmatprep.subr.mxu0 0.0
    %871 = vmatpush1.msra.mxu0 0.0
    %872 = vmatprep.subr.mxu0 0.0
    %873 = vmatpush1.msra.mxu0 0.0
    %874 = vmatprep.subr.mxu0 0.0
    %875 = vmatpush1.msra.mxu0 0.0
    %876 = vmatprep.subr.mxu0 0.0
    %877 = vmatpush1.msra.mxu0 0.0
    %878 = vmatprep.subr.mxu0 0.0
    %879 = vmatpush1.msra.mxu0 0.0
    %880 = vmatprep.subr.mxu0 0.0
    %881 = vmatpush1.msra.mxu0 0.0
    %882 = vmatprep.subr.mxu0 0.0
    %883 = vmatpush1.msra.mxu0 0.0
    %884 = vmatprep.subr.mxu0 0.0
    %885 = vmatpush1.msra.mxu0 0.0
    %886 = vmatprep.subr.mxu0 0.0
    %887 = vmatpush1.msra.mxu0 0.0
    %888 = vmatprep.subr.mxu0 0.0
    %889 = vmatpush1.msra.mxu0 0.0
    %890 = vmatprep.subr.mxu0 0.0
    %891 = vmatpush1.msra.mxu0 0.0
    %892 = vmatprep.subr.mxu0 0.0
    %893 = vmatpush1.msra.mxu0 %v857
    %894 = vmatprep.subr.mxu0 0.0
    %895 = vmatpush1.msra.mxu0 %v856
    %896 = vmatprep.subr.mxu0 0.0
    %897 = vmatpush1.msra.mxu0 %v855
    %898 = vmatprep.subr.mxu0 0.0
    %899 = vmatpush1.msra.mxu0 %v854
    %900 = vmatprep.subr.mxu0 0.0
    %901 = vmatpush2.msra.mxu0 0.0
    %902 = vmatprep.subr.mxu0 0.0
    %903 = vmatpush2.msra.mxu0 0.0
    %904 = vmatprep.subr.mxu0 0.0
    %905 = vmatpush2.msra.mxu0 0.0
    %906 = vmatprep.subr.mxu0 0.0
    %907 = vmatpush2.msra.mxu0 0.0
    %908 = vmatprep.subr.mxu0 0.0
    %909 = vmatpush2.msra.mxu0 0.0
    %910 = vmatprep.subr.mxu0 0.0
    %911 = vmatpush2.msra.mxu0 0.0
    %912 = vmatprep.subr.mxu0 0.0
    %913 = vmatpush2.msra.mxu0 0.0
    %914 = vmatprep.subr.mxu0 0.0
    %915 = vmatpush2.msra.mxu0 0.0
    %916 = vmatprep.subr.mxu0 0.0
    %917 = vmatpush2.msra.mxu0 0.0
    %918 = vmatprep.subr.mxu0 0.0
    %919 = vmatpush2.msra.mxu0 0.0
    %920 = vmatprep.subr.mxu0 0.0
    %921 = vmatpush2.msra.mxu0 0.0
    %922 = vmatprep.subr.mxu0 0.0
    %923 = vmatpush2.msra.mxu0 0.0
    %924 = vmatprep.subr.mxu0 0.0
    %925 = vmatpush2.msra.mxu0 0.0
    %926 = vmatprep.subr.mxu0 0.0
    %927 = vmatpush2.msra.mxu0 0.0
    %928 = vmatprep.subr.mxu0 0.0
    %929 = vmatpush2.msra.mxu0 0.0
    %930 = vmatprep.subr.mxu0 0.0
    %931 = vmatpush2.msra.mxu0 0.0
    %932 = vmatprep.mubr.f32.mxu0 0.0
    %933 = vmatmul.mubr.f32.gmra.mxu0 %v866
    %v934 = vpop.f32.mrf.mxu0
    %v935 = vadd.f32 %v863, %v934
    %v936 = vpop.f32.mrf.mxu0
    %937 = vdwg.mxu0
    %vm938 = vcmask 33792
    %v939 = vsel %vm938, %v935, -inf
    %940 = vmax.xlane.f32.xlu0 %v939
    %v941 = vpop.xlane.xlu0 %940
    %v942 = vsub.f32 %v935, %v941
    %v943 = vmul.f32 %v942, 1.442695
    %v944 = vpow.pop %v943
    %v945 = vsel %vm938, %v944, 0.0
    %946 = vadd.xlane.f32.xlu0 %v945
    %v947 = vpop.xlane.xlu0 %946
    %v948 = vrcp.pop %v947
    %v949 = vmul.f32 %v944, %v948
    %950 = vst.msk [vmem:[#allocation2] sm:$0x3] %vm938, %v949
    // Predicated region
    $region30: #{tpu_custom_call.1} parent=1 // pred_check
      _
    $region31: #{tpu_custom_call.1} parent=1 // pred_check_branch
      %952 = sbr.rel (0) target = $region33
    $region32: #{tpu_custom_call.1} parent=1 // pred_region
      %s954 = ssub.s32 32, 32
      %955 = vsyncadd [#allocation3], %s954
      %s957 = sshll.u32 [#allocation2], 4
      %s958 = int_to_ptr.vmem [resolvable:$true] %s957
      %960 = dma.vmem_to_hbm [thread:$0]  %s958, 32, %s7, [#allocation3]
    $region33: #{tpu_custom_call.1} parent=1 // pred_fallthru
      _
    // Predicated region
    $region34: #{tpu_custom_call.1} parent=1 // pred_check
      _
    $region35: #{tpu_custom_call.1} parent=1 // pred_check_branch
      %962 = sbr.rel (0) target = $region37
    $region36: #{tpu_custom_call.1} parent=1 // pred_region
      %963 = dma.done [#allocation3], 32
    $region37: #{tpu_custom_call.1} parent=1 // pred_fallthru
      _
    %964 = vsyncpa [#allocation3], 1

</llo_original>
